<compile_context>
chip_gen: v5e
topology: v5e:2x2
jax: 0.10.0
libtpu: 0.0.40
codegen_flags: <defaults>
</compile_context>

<pallas_src>
import math

import jax
import jax.numpy as jnp
from jax.experimental import pallas as pl
from jax.experimental.pallas import tpu as pltpu


def _dyt_kernel(alpha_ref, gamma_ref, beta_ref, x_ref, o_ref):
    # alpha_ref: SMEM (1,) f32; gamma_ref/beta_ref: VMEM (1, H); x/o: (tile, H)
    alpha = alpha_ref[0]
    x = x_ref[...].astype(jnp.float32)
    g = gamma_ref[...].astype(jnp.float32)
    b = beta_ref[...].astype(jnp.float32)
    o_ref[...] = (jnp.tanh(alpha * x) * g + b).astype(o_ref.dtype)


def _dyt_kernel_nobeta(alpha_ref, gamma_ref, x_ref, o_ref):
    alpha = alpha_ref[0]
    x = x_ref[...].astype(jnp.float32)
    g = gamma_ref[...].astype(jnp.float32)
    o_ref[...] = (jnp.tanh(alpha * x) * g).astype(o_ref.dtype)


def _sublane_multiple(itemsize):
    # minimum sublane packing per dtype width
    return {1: 32, 2: 16, 4: 8}.get(itemsize, 8)


def liger_dyt_forward(x, alpha, gamma, beta=None, *, tile_rows=None):
    """x: (..., hidden). alpha: (1,). gamma/beta: (hidden,)."""
    orig_shape = x.shape
    hidden = orig_shape[-1]
    x2d = x.reshape(-1, hidden)
    rows = x2d.shape[0]

    # --- lane-dense fold: make the last dim a multiple of 128 when cheap -----
    fold = 1
    if hidden % 128 != 0:
        f = math.lcm(hidden, 128) // hidden
        if f > 1 and rows % f == 0:
            fold = f
    hidden_f = hidden * fold
    rows_f = rows // fold
    x2d = x2d.reshape(rows_f, hidden_f)

    gamma_row = jnp.tile(gamma.reshape(-1), fold).reshape(1, hidden_f).astype(x.dtype)
    beta_row = None
    if beta is not None:
        beta_row = jnp.tile(beta.reshape(-1), fold).reshape(1, hidden_f).astype(x.dtype)

    # alpha stays f32 in SMEM (32-bit scalars anyway); compute happens in f32.
    alpha1d = alpha.reshape(1).astype(jnp.float32)

    # --- tile-size / VMEM-budget selection -----------------------------------
    itemsize = jnp.dtype(x.dtype).itemsize
    sub = _sublane_multiple(itemsize)
    try:
        vmem_cap = int(pltpu.get_tpu_info().vmem_capacity_bytes)
    except Exception:
        vmem_cap = 64 << 20  # conservative (v7x physical VMEM per TC)

    if tile_rows is None:
        # double-buffered input + output tiles must fit the budget
        budget = min(int(vmem_cap * 0.4), 48 << 20)
        per_row = 2 * hidden_f * (itemsize + itemsize)  # 2 bufs * (in + out)
        tile_rows = max(budget // max(per_row, 1), sub)
        tile_rows = min(int(tile_rows), 4096)

    if tile_rows >= rows_f:
        # full-extent block: legal regardless of divisibility
        tile_rows = rows_f
    else:
        tile_rows = max((int(tile_rows) // sub) * sub, sub)

    grid = (pl.cdiv(rows_f, tile_rows),)

    needed = (2 * tile_rows * hidden_f * (itemsize + itemsize)
              + 4 * hidden_f * itemsize)
    vmem_limit = int(min(max(needed + (8 << 20), 32 << 20), (vmem_cap * 3) // 4))

    x_spec = pl.BlockSpec((tile_rows, hidden_f), lambda i: (i, 0))
    row_spec = pl.BlockSpec((1, hidden_f), lambda i: (0, 0))
    smem_spec = pl.BlockSpec(memory_space=pltpu.MemorySpace.SMEM)
    out_spec = pl.BlockSpec((tile_rows, hidden_f), lambda i: (i, 0))

    if beta_row is None:
        kernel = _dyt_kernel_nobeta
        in_specs = [smem_spec, row_spec, x_spec]
        args = (alpha1d, gamma_row, x2d)
    else:
        kernel = _dyt_kernel
        in_specs = [smem_spec, row_spec, row_spec, x_spec]
        args = (alpha1d, gamma_row, beta_row, x2d)

    out = pl.pallas_call(
        kernel,
        out_shape=jax.ShapeDtypeStruct((rows_f, hidden_f), x.dtype),
        grid_spec=pltpu.PrefetchScalarGridSpec(
            num_scalar_prefetch=0,
            grid=grid,
            in_specs=in_specs,
            out_specs=out_spec,
        ),
        compiler_params=pltpu.CompilerParams(
            dimension_semantics=("parallel",),   # lets v7x shard rows across 2 TCs
            vmem_limit_bytes=vmem_limit,
        ),
    )(*args)

    return out.reshape(orig_shape)


class LigerDyTPallas:
    """JAX/Pallas counterpart of the PyTorch LigerDyT module (forward only)."""
    # TODO(synk): backward (custom VJP) not implemented; forward matches LigerDyTFunction.

    def __init__(self, hidden_size, beta=True, init_alpha=0.5, dtype=jnp.float32):
        self.hidden_size = hidden_size
        self.init_alpha = init_alpha
        self.alpha = jnp.ones((1,), dtype=dtype) * init_alpha
        self.gamma = jnp.ones((hidden_size,), dtype=dtype)
        self.beta = jnp.zeros((hidden_size,), dtype=dtype) if beta else None

    def __call__(self, x):
        return liger_dyt_forward(x, self.alpha, self.gamma, self.beta)


if __name__ == "__main__":
    key = jax.random.PRNGKey(0)
    batch, seq, hidden = 2, 8, 32
    x = jax.random.normal(key, (batch, seq, hidden), dtype=jnp.float32)

    module = LigerDyTPallas(hidden_size=hidden, beta=True, init_alpha=0.5)
    kg, kb = jax.random.split(jax.random.PRNGKey(1))
    module.gamma = jax.random.normal(kg, (hidden,), dtype=jnp.float32)
    module.beta = jax.random.normal(kb, (hidden,), dtype=jnp.float32)

    y = module(x)
    y = jax.block_until_ready(y)
    ref = jnp.tanh(module.alpha[0] * x) * module.gamma + module.beta
    assert y.shape == x.shape
    assert jnp.allclose(y, ref, atol=1e-5, rtol=1e-5)

    # no-beta path
    module_nb = LigerDyTPallas(hidden_size=hidden, beta=False, init_alpha=0.5)
    module_nb.gamma = module.gamma
    y_nb = jax.block_until_ready(module_nb(x))
    ref_nb = jnp.tanh(module_nb.alpha[0] * x) * module_nb.gamma
    assert jnp.allclose(y_nb, ref_nb, atol=1e-5, rtol=1e-5)

    print("KERNEL_OK")
</pallas_src>

<mosaic_0001>
module attributes {stable_mosaic.version = 11 : i64} {
  func.func @_dyt_kernel(%arg0: i32, %arg1: memref<1xf32, #tpu.memory_space<smem>>, %arg2: memref<1x128xf32, #tpu.memory_space<vmem>>, %arg3: memref<1x128xf32, #tpu.memory_space<vmem>>, %arg4: memref<4x128xf32, #tpu.memory_space<vmem>>, %arg5: memref<4x128xf32, #tpu.memory_space<vmem>>) attributes {dimension_semantics = [#tpu.dimension_semantics<parallel>], iteration_bounds = array<i64: 1>, scalar_prefetch = 0 : i64, scratch_operands = 0 : i64, tpu.core_type = #tpu.core_type<tc>, window_params = [{transform_indices = @transform_0, window_bounds = array<i64: 1>}, {pipeline_mode = #tpu.pipeline_mode<synchronous>, transform_indices = @transform_1, window_bounds = array<i64: 1, 128>}, {pipeline_mode = #tpu.pipeline_mode<synchronous>, transform_indices = @transform_2, window_bounds = array<i64: 1, 128>}, {transform_indices = @transform_3, window_bounds = array<i64: 4, 128>}, {transform_indices = @transform_4, window_bounds = array<i64: 4, 128>}]} {
    %c0 = arith.constant 0 : index
    %0 = memref.load %arg1[%c0] : memref<1xf32, #tpu.memory_space<smem>>
    %c0_0 = arith.constant 0 : index
    %c0_1 = arith.constant 0 : index
    %1 = vector.load %arg4[%c0_0, %c0_1] : memref<4x128xf32, #tpu.memory_space<vmem>>, vector<4x128xf32>
    %c0_2 = arith.constant 0 : index
    %c0_3 = arith.constant 0 : index
    %2 = vector.load %arg2[%c0_2, %c0_3] : memref<1x128xf32, #tpu.memory_space<vmem>>, vector<1x128xf32>
    %c0_4 = arith.constant 0 : index
    %c0_5 = arith.constant 0 : index
    %3 = vector.load %arg3[%c0_4, %c0_5] : memref<1x128xf32, #tpu.memory_space<vmem>>, vector<1x128xf32>
    %4 = vector.broadcast %0 : f32 to vector<4x128xf32>
    %5 = arith.mulf %4, %1 : vector<4x128xf32>
    %6 = math.tanh %5 : vector<4x128xf32>
    %7 = vector.broadcast %2 : vector<1x128xf32> to vector<4x128xf32>
    %8 = arith.mulf %6, %7 : vector<4x128xf32>
    %9 = vector.broadcast %3 : vector<1x128xf32> to vector<4x128xf32>
    %10 = arith.addf %8, %9 : vector<4x128xf32>
    %c0_6 = arith.constant 0 : index
    %c0_7 = arith.constant 0 : index
    %11 = vector.load %arg5[%c0_6, %c0_7] : memref<4x128xf32, #tpu.memory_space<vmem>>, vector<4x128xf32>
    tpu.vector_store %arg5[%c0_6, %c0_7], %10 {strides = array<i32>} : memref<4x128xf32, #tpu.memory_space<vmem>>, vector<4x128xf32>,
    return
  }
  func.func @transform_0(%arg0: i32) -> i32 {
    %c0_i32 = arith.constant 0 : i32
    %c0_i32_0 = arith.constant 0 : i32
    return %c0_i32 : i32
  }
  func.func @transform_1(%arg0: i32) -> (i32, i32) {
    %c0_i32 = arith.constant 0 : i32
    %c0_i32_0 = arith.constant 0 : i32
    %c0_i32_1 = arith.constant 0 : i32
    return %c0_i32, %c0_i32_0 : i32, i32
  }
  func.func @transform_2(%arg0: i32) -> (i32, i32) {
    %c0_i32 = arith.constant 0 : i32
    %c0_i32_0 = arith.constant 0 : i32
    %c0_i32_1 = arith.constant 0 : i32
    return %c0_i32, %c0_i32_0 : i32, i32
  }
  func.func @transform_3(%arg0: i32) -> (i32, i32) {
    %c0_i32 = arith.constant 0 : i32
    %c0_i32_0 = arith.constant 0 : i32
    return %arg0, %c0_i32 : i32, i32
  }
  func.func @transform_4(%arg0: i32) -> (i32, i32) {
    %c0_i32 = arith.constant 0 : i32
    %c0_i32_0 = arith.constant 0 : i32
    return %arg0, %c0_i32 : i32, i32
  }
}

</mosaic_0001>

<llo_original>
// kernel: tpu_custom_call.1
$region0: #{tpu_custom_call.1}
  #allocation0 [shape = 'u32[]', space=smem, size = 0x4, offset = 0x4, fixed_abs, tag = 'smem constant byte address 0x4 - core index']
  #allocation1 [shape = 'u32[72,128]{1,0:T(1,128)}', space=vmem, size = 0x9000, scoped, tag = 'internal scratch']
  #allocation2 [shape = 'f32[1]{0:T(128)S(6)}', space=smem, size = 0x200, scoped, tag = 'scoped memory for tpu_custom_call.1']
  %s0 = inlined_call_operand.<no memory space> [shape: f32[1], index: 0, kind: input, shape index: {}]
  %s1 = inlined_call_operand.vmem [shape: f32[1,128], index: 1, kind: input, shape index: {}]
  %s2 = inlined_call_operand.vmem [shape: f32[1,128], index: 2, kind: input, shape index: {}]
  %s3 = inlined_call_operand.hbm [shape: f32[4,128], index: 3, kind: input, shape index: {}]
  %s4 = inlined_call_operand.hbm [shape: f32[4,128], index: 4, kind: output, shape index: {}]
  %s5 = sld [smem:[#allocation0]]
  $region30: #{tpu_custom_call.1} parent=0
    _
  %s7 = ssub.s32 1, %s5
  %s8 = scalar_select 0, %s7, %s5
  %9 = sst [smem:[#allocation2]] %s0
  $region1: #{tpu_custom_call.1} parent=0
    #allocation3 [shape = 'u8[2048]{0}', space=vmem, size = 0x800, scoped, tag = 'input window, operand 3, single buffered']
    #allocation4 [shape = 's32[1]{0}', space=sflag, size = 0x4, scoped, tag = 'scoped memory for tpu_custom_call.1']
    #allocation5 [shape = 's32[1]{0}', space=sflag, size = 0x4, scoped, tag = 'scoped memory for tpu_custom_call.1']
    #allocation6 [shape = 'u8[2048]{0}', space=vmem, size = 0x800, scoped, tag = 'output window, operand 0, single buffered']
    %10 = vsyncpa [#allocation4], 0
    %11 = vsyncpa [#allocation5], 0
    // Predicated region
    $region2: #{tpu_custom_call.1} parent=1 // pred_check
      _
    $region3: #{tpu_custom_call.1} parent=1 // pred_check_branch
      %13 = sbr.rel (0) target = $region5
    $region4: #{tpu_custom_call.1} parent=1 // pred_region
      _
    $region5: #{tpu_custom_call.1} parent=1 // pred_fallthru
      _
    // Predicated region
    $region6: #{tpu_custom_call.1} parent=1 // pred_check
      _
    $region7: #{tpu_custom_call.1} parent=1 // pred_check_branch
      %15 = sbr.rel (0) target = $region9
    $region8: #{tpu_custom_call.1} parent=1 // pred_region
      _
    $region9: #{tpu_custom_call.1} parent=1 // pred_fallthru
      _
    // Predicated region
    $region10: #{tpu_custom_call.1} parent=1 // pred_check
      _
    $region11: #{tpu_custom_call.1} parent=1 // pred_check_branch
      %17 = sbr.rel (0) target = $region13
    $region12: #{tpu_custom_call.1} parent=1 // pred_region
      _
    $region13: #{tpu_custom_call.1} parent=1 // pred_fallthru
      _
    // Predicated region
    $region14: #{tpu_custom_call.1} parent=1 // pred_check
      _
    $region15: #{tpu_custom_call.1} parent=1 // pred_check_branch
      %19 = sbr.rel (0) target = $region17
    $region16: #{tpu_custom_call.1} parent=1 // pred_region
      %21 = vsyncadd [#allocation4], 0
      %s23 = sshll.u32 %s3, 4
      %s24 = int_to_ptr.hbm [resolvable:$true] %s23
      %s25 = sshll.u32 [#allocation3], 4
      %s26 = int_to_ptr.vmem [resolvable:$true] %s25
      %28 = dma.hbm_to_vmem [thread:$0]  %s24, 64, %s26, [#allocation4]
    $region17: #{tpu_custom_call.1} parent=1 // pred_fallthru
      _
    // Predicated region
    $region18: #{tpu_custom_call.1} parent=1 // pred_check
      _
    $region19: #{tpu_custom_call.1} parent=1 // pred_check_branch
      %30 = sbr.rel (0) target = $region21
    $region20: #{tpu_custom_call.1} parent=1 // pred_region
      %32 = dma.done [#allocation4], 64
    $region21: #{tpu_custom_call.1} parent=1 // pred_fallthru
      _
    %s33 = sld [smem:[#allocation2]]
    %v34 = vld [vmem:[#allocation3] sm:$0xf]
    %v35 = vld [vmem:[%s1] sm:$0x1]
    %v36 = vld [vmem:[%s2] sm:$0x1]
    %v37 = vstv %s33
    %v38 = vmul.f32 %v37, %v34
    %v39 = vtanh.pop %v38
    %v41 = vperm.slane %v35, 0
    %v43 = vmul.f32 %v39, %v41
    %v45 = vperm.slane %v36, 0
    %v47 = vadd.f32 %v43, %v45
    %48 = vst [vmem:[#allocation6] sm:$0xf] %v47
    // Predicated region
    $region22: #{tpu_custom_call.1} parent=1 // pred_check
      _
    $region23: #{tpu_custom_call.1} parent=1 // pred_check_branch
      %50 = sbr.rel (0) target = $region25
    $region24: #{tpu_custom_call.1} parent=1 // pred_region
      %52 = vsyncadd [#allocation5], 0
      %s54 = sshll.u32 [#allocation6], 4
      %s55 = int_to_ptr.vmem [resolvable:$true] %s54
      %s56 = sshll.u32 %s4, 4
      %s57 = int_to_ptr.hbm [resolvable:$true] %s56
      %59 = dma.vmem_to_hbm [thread:$0]  %s55, 64, %s57, [#allocation5]
    $region25: #{tpu_custom_call.1} parent=1 // pred_fallthru
      _
    // Predicated region
    $region26: #{tpu_custom_call.1} parent=1 // pred_check
      _
    $region27: #{tpu_custom_call.1} parent=1 // pred_check_branch
      %61 = sbr.rel (0) target = $region29
    $region28: #{tpu_custom_call.1} parent=1 // pred_region
      %63 = dma.done [#allocation5], 64
    $region29: #{tpu_custom_call.1} parent=1 // pred_fallthru
      _
    %64 = vsyncpa [#allocation4], 1
    %65 = vsyncpa [#allocation5], 1

</llo_original>
